<compile_context>
chip_gen: v5e
topology: v5e:2x2
jax: 0.10.0
libtpu: 0.0.40
codegen_flags: <defaults>
</compile_context>

<pallas_src>
import functools

import numpy as np
import jax
import jax.numpy as jnp
from jax.experimental import pallas as pl
from jax.experimental.pallas import tpu as pltpu


# ---------------------------------------------------------------------------
# Pointwise (kernel-size 1) Conv1d:  out[n,o,t] = b[o] + sum_i w[o,i] * x[n,i,t]
# Optionally crops the time axis first (Cropping1D fused in) and/or emits
# per-channel sum / sum-of-squares of its output (train-mode BN statistics).
# ---------------------------------------------------------------------------
def _pointwise_conv_kernel(x_ref, w_ref, b_ref, *rest, crop, T_out, compute_stats):
    if compute_stats:
        o_ref, sum_ref, sq_ref = rest
    else:
        (o_ref,) = rest

    x = x_ref[0]                                   # (Cin, T) f32
    if crop > 0:
        x = x[:, crop:crop + T_out]                # in-kernel Cropping1D

    out = jnp.dot(w_ref[...], x.astype(jnp.bfloat16),
                  preferred_element_type=jnp.float32)
    out = out + b_ref[...]                         # bias epilogue, (Cout,1) bcast
    o_ref[0] = out.astype(o_ref.dtype)

    if compute_stats:
        s = jnp.sum(out, axis=1, keepdims=True)
        q = jnp.sum(out * out, axis=1, keepdims=True)
        n = pl.program_id(0)

        @pl.when(n == 0)
        def _():
            sum_ref[...] = s
            sq_ref[...] = q

        @pl.when(n > 0)
        def _():
            sum_ref[...] = sum_ref[...] + s
            sq_ref[...] = sq_ref[...] + q


def pointwise_conv(x, w, b, *, crop=0, compute_stats=False):
    N, Cin, T = x.shape
    Cout = w.shape[0]
    T_out = T - 2 * crop

    kernel = functools.partial(_pointwise_conv_kernel, crop=crop, T_out=T_out,
                               compute_stats=compute_stats)

    in_specs = [
        pl.BlockSpec((1, Cin, T), lambda n: (n, 0, 0)),
        pl.BlockSpec((Cout, Cin), lambda n: (0, 0)),
        pl.BlockSpec((Cout, 1), lambda n: (0, 0)),
    ]
    args = [x, w.astype(jnp.bfloat16), b.reshape(Cout, 1)]

    if compute_stats:
        out_shape = (jax.ShapeDtypeStruct((N, Cout, T_out), x.dtype),
                     jax.ShapeDtypeStruct((Cout, 1), jnp.float32),
                     jax.ShapeDtypeStruct((Cout, 1), jnp.float32))
        out_specs = (pl.BlockSpec((1, Cout, T_out), lambda n: (n, 0, 0)),
                     pl.BlockSpec((Cout, 1), lambda n: (0, 0)),
                     pl.BlockSpec((Cout, 1), lambda n: (0, 0)))
        sem = ("arbitrary",)     # stats blocks revisited across the N axis
    else:
        out_shape = jax.ShapeDtypeStruct((N, Cout, T_out), x.dtype)
        out_specs = pl.BlockSpec((1, Cout, T_out), lambda n: (n, 0, 0))
        sem = ("parallel",)

    outs = pl.pallas_call(
        kernel,
        out_shape=out_shape,
        grid=(N,),
        in_specs=in_specs,
        out_specs=out_specs,
        compiler_params=pltpu.CompilerParams(dimension_semantics=sem),
    )(*args)

    if compute_stats:
        y, s, q = outs
        return y, (s, q)
    return outs, None


# ---------------------------------------------------------------------------
# Fused  BN(apply scale/shift) -> LeakyReLU(0.1) -> dilated Conv1d (+ residual)
# Zero padding is realized with a VMEM scratch halo; the kw dilated taps are
# stacked along the contraction axis and contracted with ONE bf16 matmul.
# ---------------------------------------------------------------------------
def _dconv_kernel(x_ref, scale_ref, shift_ref, w_ref, b_ref, *rest,
                  kw, ar, pad, T, neg_slope, add_residual, compute_stats):
    rest = list(rest)
    res_ref = rest.pop(0) if add_residual else None
    o_ref = rest.pop(0)
    if compute_stats:
        sum_ref = rest.pop(0)
        sq_ref = rest.pop(0)
    ypad_ref = rest.pop(0)                          # VMEM scratch (C, T + 2*pad) f32

    x = x_ref[0]                                    # (C, T) f32
    C = x.shape[0]

    # BatchNorm apply + LeakyReLU(0.1)  (f32 elementwise on the VPU)
    y = scale_ref[...] * x + shift_ref[...]
    y = jnp.where(y > 0, y, neg_slope * y)

    # Zero padding applied AFTER the activation (PyTorch conv padding semantics):
    # zero only the halo columns of the scratch, write the activated interior.
    if pad > 0:
        halo = jnp.zeros((C, pad), jnp.float32)
        ypad_ref[:, :pad] = halo
        ypad_ref[:, pad + T:] = halo
    ypad_ref[:, pad:pad + T] = y

    # Stack the kw dilated taps along the contraction axis:
    #   ys[k*C + i, t] = y_padded[i, t + k*ar]      -> (kw*C, T)
    ypad = ypad_ref[...]
    ys = jnp.concatenate([ypad[:, k * ar:k * ar + T] for k in range(kw)], axis=0)

    # One MXU matmul with K = kw*C (bf16 operands, f32 accumulation).
    acc = jnp.dot(w_ref[...], ys.astype(jnp.bfloat16),
                  preferred_element_type=jnp.float32)           # (C, T)
    acc = acc + b_ref[...]
    if add_residual:
        acc = acc + res_ref[0].astype(jnp.float32)
    o_ref[0] = acc.astype(o_ref.dtype)

    if compute_stats:
        s = jnp.sum(acc, axis=1, keepdims=True)
        q = jnp.sum(acc * acc, axis=1, keepdims=True)
        n = pl.program_id(0)

        @pl.when(n == 0)
        def _():
            sum_ref[...] = s
            sq_ref[...] = q

        @pl.when(n > 0)
        def _():
            sum_ref[...] = sum_ref[...] + s
            sq_ref[...] = sq_ref[...] + q


def fused_bn_lrelu_dconv(x, stats, gamma, beta, conv_w, conv_b, *, kw, ar,
                         residual=None, compute_stats=False,
                         eps=1e-5, neg_slope=0.1):
    """BN (train-mode stats from `stats`) -> LeakyReLU(0.1) -> dilated Conv1d [+res].

    `stats` = (sum, sumsq) per channel of x, produced by the kernel that wrote x.
    Returns (y, y_stats) where y_stats = (sum, sumsq) of y, or None.
    """
    N, C, T = x.shape
    x_sum, x_sumsq = stats
    count = jnp.float32(N * T)
    mean = x_sum[:, 0] / count
    var = jnp.maximum(x_sumsq[:, 0] / count - mean * mean, 0.0)   # biased, train mode
    scale = gamma / jnp.sqrt(var + eps)
    shift = beta - mean * scale

    pad = (kw - 1) * ar // 2
    # conv_w stored as (kw, Cout, Cin); stack taps along the contraction dim:
    # w2d[o, k*C + i] = conv_w[k, o, i]
    w2d = jnp.transpose(conv_w, (1, 0, 2)).reshape(C, kw * C).astype(jnp.bfloat16)

    kernel = functools.partial(
        _dconv_kernel, kw=kw, ar=ar, pad=pad, T=T, neg_slope=neg_slope,
        add_residual=residual is not None, compute_stats=compute_stats)

    in_specs = [
        pl.BlockSpec((1, C, T), lambda n: (n, 0, 0)),
        pl.BlockSpec((C, 1), lambda n: (0, 0)),
        pl.BlockSpec((C, 1), lambda n: (0, 0)),
        pl.BlockSpec((C, kw * C), lambda n: (0, 0)),
        pl.BlockSpec((C, 1), lambda n: (0, 0)),
    ]
    args = [x, scale.reshape(C, 1), shift.reshape(C, 1), w2d, conv_b.reshape(C, 1)]
    if residual is not None:
        in_specs.append(pl.BlockSpec((1, C, T), lambda n: (n, 0, 0)))
        args.append(residual)

    if compute_stats:
        out_shape = (jax.ShapeDtypeStruct((N, C, T), x.dtype),
                     jax.ShapeDtypeStruct((C, 1), jnp.float32),
                     jax.ShapeDtypeStruct((C, 1), jnp.float32))
        out_specs = (pl.BlockSpec((1, C, T), lambda n: (n, 0, 0)),
                     pl.BlockSpec((C, 1), lambda n: (0, 0)),
                     pl.BlockSpec((C, 1), lambda n: (0, 0)))
        sem = ("arbitrary",)     # stats blocks revisited across the N axis
    else:
        out_shape = jax.ShapeDtypeStruct((N, C, T), x.dtype)
        out_specs = pl.BlockSpec((1, C, T), lambda n: (n, 0, 0))
        sem = ("parallel",)

    outs = pl.pallas_call(
        kernel,
        out_shape=out_shape,
        grid=(N,),
        in_specs=in_specs,
        out_specs=out_specs,
        scratch_shapes=[pltpu.VMEM((C, T + 2 * pad), jnp.float32)],
        compiler_params=pltpu.CompilerParams(dimension_semantics=sem),
    )(*args)

    if compute_stats:
        y, s, q = outs
        return y, (s, q)
    return outs, None


# ---------------------------------------------------------------------------
# Parameter init (deterministic, synthetic) and full forward pass
# ---------------------------------------------------------------------------
def init_spliceai_params(key, L, W_arr, AR_arr):
    keys = iter(jax.random.split(key, 4 + 8 * len(W_arr)))

    def rnd(shape, scale=0.1):
        return scale * jax.random.normal(next(keys), shape, dtype=jnp.float32)

    params = {
        # initial 1x1 conv: PyTorch weight (L, 4, 1) stored as (L, 4)
        "init_w": rnd((L, 4)),
        "init_b": rnd((L,)),
        "units": [],
        # final 1x1 conv: PyTorch weight (3, L, 1) stored as (3, L)
        "final_w": rnd((3, L)),
        "final_b": rnd((3,)),
    }
    for i in range(len(W_arr)):
        w = int(W_arr[i])
        params["units"].append(dict(
            gamma1=1.0 + rnd((L,)), beta1=rnd((L,)),
            # dilated conv weight: PyTorch (Cout, Cin, W) stored as (W, Cout, Cin)
            conv1_w=rnd((w, L, L)), conv1_b=rnd((L,)),
            gamma2=1.0 + rnd((L,)), beta2=rnd((L,)),
            conv2_w=rnd((w, L, L)), conv2_b=rnd((L,)),
        ))
    return params


def spliceai_forward(x, params, W_arr, AR_arr):
    n_units = len(params["units"])

    # initial 1x1 conv (emits BN stats for the first residual unit)
    x, stats = pointwise_conv(x, params["init_w"], params["init_b"],
                              compute_stats=n_units > 0)

    # residual units (each conv kernel emits the stats its consumer BN needs)
    for i, u in enumerate(params["units"]):
        kw, ar = int(W_arr[i]), int(AR_arr[i])
        h, h_stats = fused_bn_lrelu_dconv(
            x, stats, u["gamma1"], u["beta1"], u["conv1_w"], u["conv1_b"],
            kw=kw, ar=ar, compute_stats=True)
        x, stats = fused_bn_lrelu_dconv(
            h, h_stats, u["gamma2"], u["beta2"], u["conv2_w"], u["conv2_b"],
            kw=kw, ar=ar, residual=x, compute_stats=i + 1 < n_units)

    # Cropping1D(CL//2, CL//2) fused into the final 1x1 conv kernel.
    CL = 2 * int(np.sum(AR_arr * (W_arr - 1)))
    out, _ = pointwise_conv(x, params["final_w"], params["final_b"], crop=CL // 2)
    return out


# ---------------------------------------------------------------------------
# Pure-JAX f32 reference (mirrors the PyTorch module, train-mode BN)
# ---------------------------------------------------------------------------
def ref_forward(x, params, W_arr, AR_arr, eps=1e-5):
    def conv1x1(x, w, b):
        return jnp.einsum("oi,nit->not", w, x) + b[None, :, None]

    def bn(x, gamma, beta):
        mean = jnp.mean(x, axis=(0, 2), keepdims=True)
        var = jnp.var(x, axis=(0, 2), keepdims=True)
        return gamma[None, :, None] * (x - mean) / jnp.sqrt(var + eps) \
            + beta[None, :, None]

    def lrelu(x):
        return jnp.where(x > 0, x, 0.1 * x)

    def dconv(x, w, b, ar):
        kw = w.shape[0]
        pad = (kw - 1) * ar // 2
        wt = jnp.transpose(w, (1, 2, 0))           # (Cout, Cin, kw)
        y = jax.lax.conv_general_dilated(
            x, wt, window_strides=(1,), padding=[(pad, pad)],
            rhs_dilation=(ar,), dimension_numbers=("NCH", "OIH", "NCH"))
        return y + b[None, :, None]

    x = conv1x1(x, params["init_w"], params["init_b"])
    for i, u in enumerate(params["units"]):
        ar = int(AR_arr[i])
        h = dconv(lrelu(bn(x, u["gamma1"], u["beta1"])), u["conv1_w"], u["conv1_b"], ar)
        h = dconv(lrelu(bn(h, u["gamma2"], u["beta2"])), u["conv2_w"], u["conv2_b"], ar)
        x = x + h
    CL = 2 * int(np.sum(AR_arr * (W_arr - 1)))
    c = CL // 2
    if c > 0:
        x = x[:, :, c:x.shape[2] - c]
    return conv1x1(x, params["final_w"], params["final_b"])


if __name__ == "__main__":
    # Small SpliceAI configuration: L=32 channels, two residual units.
    L = 32
    W_arr = np.array([5, 5])
    AR_arr = np.array([1, 2])
    N, T = 2, 128

    key = jax.random.PRNGKey(0)
    k_params, k_x = jax.random.split(key)
    params = init_spliceai_params(k_params, L, W_arr, AR_arr)

    # input: (batch, 4 nucleotide channels, sequence length) -- NCW like PyTorch
    x = jax.random.normal(k_x, (N, 4, T), dtype=jnp.float32)

    out = spliceai_forward(x, params, W_arr, AR_arr)
    out = jax.block_until_ready(out)

    CL = 2 * int(np.sum(AR_arr * (W_arr - 1)))
    assert out.shape == (N, 3, T - CL), out.shape
    assert bool(jnp.all(jnp.isfinite(out)))

    # Cross-check against the pure-JAX f32 reference (bf16 MXU operands => loose tol).
    ref = ref_forward(x, params, W_arr, AR_arr)
    err = float(jnp.max(jnp.abs(out - ref)))
    ref_scale = float(jnp.max(jnp.abs(ref))) + 1e-6
    assert err <= 0.05 * max(1.0, ref_scale), (err, ref_scale)

    print("KERNEL_OK")
</pallas_src>

<mosaic_0001>
module attributes {stable_mosaic.version = 11 : i64} {
  func.func @_pointwise_conv_kernel(%arg0: i32, %arg1: memref<1x4x128xf32, #tpu.memory_space<vmem>>, %arg2: memref<32x4xbf16, #tpu.memory_space<vmem>>, %arg3: memref<32x1xf32, #tpu.memory_space<vmem>>, %arg4: memref<1x32x128xf32, #tpu.memory_space<vmem>>, %arg5: memref<32x1xf32, #tpu.memory_space<vmem>>, %arg6: memref<32x1xf32, #tpu.memory_space<vmem>>) attributes {dimension_semantics = [#tpu.dimension_semantics<arbitrary>], iteration_bounds = array<i64: 2>, scalar_prefetch = 0 : i64, scratch_operands = 0 : i64, tpu.core_type = #tpu.core_type<tc>, window_params = [{transform_indices = @transform_0, window_bounds = array<i64: 1, 4, 128>}, {pipeline_mode = #tpu.pipeline_mode<synchronous>, transform_indices = @transform_1, window_bounds = array<i64: 32, 4>}, {pipeline_mode = #tpu.pipeline_mode<synchronous>, transform_indices = @transform_2, window_bounds = array<i64: 32, 1>}, {transform_indices = @transform_3, window_bounds = array<i64: 1, 32, 128>}, {pipeline_mode = #tpu.pipeline_mode<synchronous>, transform_indices = @transform_4, window_bounds = array<i64: 32, 1>}, {pipeline_mode = #tpu.pipeline_mode<synchronous>, transform_indices = @transform_5, window_bounds = array<i64: 32, 1>}]} {
    %c0 = arith.constant 0 : index
    %c0_0 = arith.constant 0 : index
    %c0_1 = arith.constant 0 : index
    %0 = vector.load %arg1[%c0, %c0_0, %c0_1] : memref<1x4x128xf32, #tpu.memory_space<vmem>>, vector<1x4x128xf32>
    %1 = vector.shape_cast %0 : vector<1x4x128xf32> to vector<4x128xf32>
    %c0_2 = arith.constant 0 : index
    %c0_3 = arith.constant 0 : index
    %2 = vector.load %arg2[%c0_2, %c0_3] : memref<32x4xbf16, #tpu.memory_space<vmem>>, vector<32x4xbf16>
    %3 = arith.truncf %1 : vector<4x128xf32> to vector<4x128xbf16>
    %cst = arith.constant dense<0.000000e+00> : vector<32x128xf32>
    %4 = tpu.matmul %2, %3, %cst {dimension_numbers = #tpu.dot_dimension_numbers<[1], [0], [0], [1], [0, 0, 1, 1], [], []>} : vector<32x4xbf16>, vector<4x128xbf16>, vector<32x128xf32> -> vector<32x128xf32>
    %c0_4 = arith.constant 0 : index
    %c0_5 = arith.constant 0 : index
    %5 = vector.load %arg3[%c0_4, %c0_5] : memref<32x1xf32, #tpu.memory_space<vmem>>, vector<32x1xf32>
    %6 = vector.broadcast %5 : vector<32x1xf32> to vector<32x128xf32>
    %7 = arith.addf %4, %6 : vector<32x128xf32>
    %c0_6 = arith.constant 0 : index
    %c0_7 = arith.constant 0 : index
    %c0_8 = arith.constant 0 : index
    %8 = vector.load %arg4[%c0_6, %c0_7, %c0_8] : memref<1x32x128xf32, #tpu.memory_space<vmem>>, vector<1x32x128xf32>
    %9 = vector.shape_cast %8 : vector<1x32x128xf32> to vector<32x128xf32>
    %10 = vector.shape_cast %7 : vector<32x128xf32> to vector<1x32x128xf32>
    tpu.vector_store %arg4[%c0_6, %c0_7, %c0_8], %10 {strides = array<i32>} : memref<1x32x128xf32, #tpu.memory_space<vmem>>, vector<1x32x128xf32>,
    %cst_9 = arith.constant dense<0.000000e+00> : vector<32xf32>
    %11 = vector.multi_reduction <add>, %7, %cst_9 [1] : vector<32x128xf32> to vector<32xf32>
    %12 = vector.shape_cast %11 : vector<32xf32> to vector<32x1xf32>
    %13 = arith.mulf %7, %7 : vector<32x128xf32>
    %cst_10 = arith.constant dense<0.000000e+00> : vector<32xf32>
    %14 = vector.multi_reduction <add>, %13, %cst_10 [1] : vector<32x128xf32> to vector<32xf32>
    %15 = vector.shape_cast %14 : vector<32xf32> to vector<32x1xf32>
    %c0_i32 = arith.constant 0 : i32
    %16 = arith.cmpi eq, %arg0, %c0_i32 : i32
    %17 = arith.extui %16 : i1 to i32
    %c0_i32_11 = arith.constant 0 : i32
    %18 = arith.cmpi ne, %17, %c0_i32_11 : i32
    scf.if %18 {
      %c0_14 = arith.constant 0 : index
      %c0_15 = arith.constant 0 : index
      %22 = vector.load %arg5[%c0_14, %c0_15] : memref<32x1xf32, #tpu.memory_space<vmem>>, vector<32x1xf32>
      tpu.vector_store %arg5[%c0_14, %c0_15], %12 {strides = array<i32>} : memref<32x1xf32, #tpu.memory_space<vmem>>, vector<32x1xf32>,
      %c0_16 = arith.constant 0 : index
      %c0_17 = arith.constant 0 : index
      %23 = vector.load %arg6[%c0_16, %c0_17] : memref<32x1xf32, #tpu.memory_space<vmem>>, vector<32x1xf32>
      tpu.vector_store %arg6[%c0_16, %c0_17], %15 {strides = array<i32>} : memref<32x1xf32, #tpu.memory_space<vmem>>, vector<32x1xf32>,
    } else {
    }
    %c0_i32_12 = arith.constant 0 : i32
    %19 = arith.cmpi sgt, %arg0, %c0_i32_12 : i32
    %20 = arith.extui %19 : i1 to i32
    %c0_i32_13 = arith.constant 0 : i32
    %21 = arith.cmpi ne, %20, %c0_i32_13 : i32
    scf.if %21 {
      %c0_14 = arith.constant 0 : index
      %c0_15 = arith.constant 0 : index
      %22 = vector.load %arg5[%c0_14, %c0_15] : memref<32x1xf32, #tpu.memory_space<vmem>>, vector<32x1xf32>
      %23 = arith.addf %22, %12 : vector<32x1xf32>
      %c0_16 = arith.constant 0 : index
      %c0_17 = arith.constant 0 : index
      %24 = vector.load %arg5[%c0_16, %c0_17] : memref<32x1xf32, #tpu.memory_space<vmem>>, vector<32x1xf32>
      tpu.vector_store %arg5[%c0_16, %c0_17], %23 {strides = array<i32>} : memref<32x1xf32, #tpu.memory_space<vmem>>, vector<32x1xf32>,
      %c0_18 = arith.constant 0 : index
      %c0_19 = arith.constant 0 : index
      %25 = vector.load %arg6[%c0_18, %c0_19] : memref<32x1xf32, #tpu.memory_space<vmem>>, vector<32x1xf32>
      %26 = arith.addf %25, %15 : vector<32x1xf32>
      %c0_20 = arith.constant 0 : index
      %c0_21 = arith.constant 0 : index
      %27 = vector.load %arg6[%c0_20, %c0_21] : memref<32x1xf32, #tpu.memory_space<vmem>>, vector<32x1xf32>
      tpu.vector_store %arg6[%c0_20, %c0_21], %26 {strides = array<i32>} : memref<32x1xf32, #tpu.memory_space<vmem>>, vector<32x1xf32>,
    } else {
    }
    return
  }
  func.func @transform_0(%arg0: i32) -> (i32, i32, i32) {
    %c0_i32 = arith.constant 0 : i32
    %c0_i32_0 = arith.constant 0 : i32
    %c0_i32_1 = arith.constant 0 : i32
    return %arg0, %c0_i32, %c0_i32_0 : i32, i32, i32
  }
  func.func @transform_1(%arg0: i32) -> (i32, i32) {
    %c0_i32 = arith.constant 0 : i32
    %c0_i32_0 = arith.constant 0 : i32
    %c0_i32_1 = arith.constant 0 : i32
    return %c0_i32, %c0_i32_0 : i32, i32
  }
  func.func @transform_2(%arg0: i32) -> (i32, i32) {
    %c0_i32 = arith.constant 0 : i32
    %c0_i32_0 = arith.constant 0 : i32
    %c0_i32_1 = arith.constant 0 : i32
    return %c0_i32, %c0_i32_0 : i32, i32
  }
  func.func @transform_3(%arg0: i32) -> (i32, i32, i32) {
    %c0_i32 = arith.constant 0 : i32
    %c0_i32_0 = arith.constant 0 : i32
    %c0_i32_1 = arith.constant 0 : i32
    return %arg0, %c0_i32, %c0_i32_0 : i32, i32, i32
  }
  func.func @transform_4(%arg0: i32) -> (i32, i32) {
    %c0_i32 = arith.constant 0 : i32
    %c0_i32_0 = arith.constant 0 : i32
    %c0_i32_1 = arith.constant 0 : i32
    return %c0_i32, %c0_i32_0 : i32, i32
  }
  func.func @transform_5(%arg0: i32) -> (i32, i32) {
    %c0_i32 = arith.constant 0 : i32
    %c0_i32_0 = arith.constant 0 : i32
    %c0_i32_1 = arith.constant 0 : i32
    return %c0_i32, %c0_i32_0 : i32, i32
  }
}

</mosaic_0001>

<llo_original>
// kernel: tpu_custom_call.1
$region0: #{tpu_custom_call.1}
  #allocation0 [shape = 'u32[]', space=smem, size = 0x4, offset = 0x4, fixed_abs, tag = 'smem constant byte address 0x4 - core index']
  #allocation1 [shape = 'u32[72,128]{1,0:T(1,128)}', space=vmem, size = 0x9000, scoped, tag = 'internal scratch']
  %s0 = inlined_call_operand.vmem [shape: f32[2,4,128], index: 0, kind: input, shape index: {}]
  %s1 = inlined_call_operand.vmem [shape: bf16[32,4], index: 1, kind: input, shape index: {}]
  %s2 = inlined_call_operand.vmem [shape: f32[32,1], index: 2, kind: input, shape index: {}]
  %s3 = inlined_call_operand.hbm [shape: f32[2,32,128], index: 3, kind: output, shape index: {0}]
  %s4 = inlined_call_operand.vmem [shape: f32[32,1], index: 4, kind: output, shape index: {1}]
  %s5 = inlined_call_operand.vmem [shape: f32[32,1], index: 5, kind: output, shape index: {2}]
  %6 = xla_tuple %s3, %s4, %s5
  %s7 = sld [smem:[#allocation0]]
  $region69: #{tpu_custom_call.1} parent=0
    _
  %s9 = ssub.s32 1, %s7
  %s10 = scalar_select 0, %s9, %s7
  $region1: #{tpu_custom_call.1} parent=0
    #allocation2 [shape = 'u8[32768]{0}', space=vmem, size = 0x8000, scoped, tag = 'output window, operand 0']
    #allocation3 [shape = 's32[2]{0}', space=sflag, size = 0x8, scoped, tag = 'scoped memory for tpu_custom_call.1']
    %11 = vsyncpa [#allocation3], 0
    %s12 = scalar_lea.sflag [#allocation3], 1
    %13 = vsyncpa %s12, 0
    loop: start=0, step=1, limit=4
    $region2: #{tpu_custom_call.1} parent=1 // loop_pre_header
      _
    $region3: #{tpu_custom_call.1} parent=1 // loop_header
      %s15 = sphi 0, %s19
      %p16 = scmp.ge.s32.totalorder %s15, 4
      %s25 = sphi 0, %s27
      %s28 = sphi 0, %s25
      %s29 = sphi 0, %s28
      %s45 = sphi 0, %s29
      %s49 = sphi 0, %s49
      %s51 = sphi 0, %s49
      %s52 = sphi 0, %s51
      %s66 = sphi 0, %s52
      %s70 = sphi 0, %s70
      %s72 = sphi 0, %s70
      %s73 = sphi 0, %s72
      %s87 = sphi 0, %s73
      %s93 = sphi 0, %s95
      %s96 = sphi 0, %s93
      %s97 = sphi 0, %s96
      %s113 = sphi 0, %s97
      %s117 = sphi 0, %s117
      %s119 = sphi 0, %s117
      %s120 = sphi 0, %s119
      %s134 = sphi 0, %s120
      %s138 = sphi 0, %s138
      %s140 = sphi 0, %s138
      %s141 = sphi 0, %s140
      %s155 = sphi 0, %s141
    $region4: #{tpu_custom_call.1} parent=1 // loop_header_branch
      %18 = sbr.rel (%p16) target = $region8
    $region5: #{tpu_custom_call.1} parent=1 // loop_body
      %s20 = ssub.s32 %s15, 1
      %s21 = ssub.s32 %s15, 2
      %s22 = sadd.s32 %s15, 1
      %s23 = ssub.s32 %s15, %s22
      %p24 = scmp.eq.s32.totalorder %s23, 0
      %s26 = sadd.s32 %s25, 1
      %s27 = scalar_select %p24, %s25, %s26
      %p30 = pneg %p24
      %p31 = scmp.eq.s32.totalorder %s15, 1
      %p32 = por %p30, %p31
      %p33 = scmp.ne.s32.totalorder %s25, %s28
      %p34 = scmp.eq.s32.totalorder %s15, 0
      %p35 = por %p33, %p34
      %p36 = scmp.ne.s32.totalorder %s25, %s28
      %p37 = scmp.eq.s32.totalorder %s20, 1
      %p38 = por %p36, %p37
      %p39 = scmp.ne.s32.totalorder %s28, %s29
      %p40 = scmp.eq.s32.totalorder %s20, 0
      %p41 = por %p39, %p40
      %p42 = scmp.ne.s32.totalorder %s28, %s29
      %p43 = scmp.eq.s32.totalorder %s21, 1
      %p44 = por %p42, %p43
      %p46 = scmp.ne.s32.totalorder %s29, %s45
      %p47 = scmp.eq.s32.totalorder %s21, 0
      %p48 = por %p46, %p47
      %s50 = sadd.s32 %s49, 1
      %p53 = scmp.eq.s32.totalorder %s15, 1
      %p54 = scmp.ne.s32.totalorder %s49, %s51
      %p55 = scmp.eq.s32.totalorder %s15, 0
      %p56 = por %p54, %p55
      %p57 = scmp.ne.s32.totalorder %s49, %s51
      %p58 = scmp.eq.s32.totalorder %s20, 1
      %p59 = por %p57, %p58
      %p60 = scmp.ne.s32.totalorder %s51, %s52
      %p61 = scmp.eq.s32.totalorder %s20, 0
      %p62 = por %p60, %p61
      %p63 = scmp.ne.s32.totalorder %s51, %s52
      %p64 = scmp.eq.s32.totalorder %s21, 1
      %p65 = por %p63, %p64
      %p67 = scmp.ne.s32.totalorder %s52, %s66
      %p68 = scmp.eq.s32.totalorder %s21, 0
      %p69 = por %p67, %p68
      %s71 = sadd.s32 %s70, 1
      %p74 = scmp.eq.s32.totalorder %s15, 1
      %p75 = scmp.ne.s32.totalorder %s70, %s72
      %p76 = scmp.eq.s32.totalorder %s15, 0
      %p77 = por %p75, %p76
      %p78 = scmp.ne.s32.totalorder %s70, %s72
      %p79 = scmp.eq.s32.totalorder %s20, 1
      %p80 = por %p78, %p79
      %p81 = scmp.ne.s32.totalorder %s72, %s73
      %p82 = scmp.eq.s32.totalorder %s20, 0
      %p83 = por %p81, %p82
      %p84 = scmp.ne.s32.totalorder %s72, %s73
      %p85 = scmp.eq.s32.totalorder %s21, 1
      %p86 = por %p84, %p85
      %p88 = scmp.ne.s32.totalorder %s73, %s87
      %p89 = scmp.eq.s32.totalorder %s21, 0
      %p90 = por %p88, %p89
      %s91 = ssub.s32 %s15, %s22
      %p92 = scmp.eq.s32.totalorder %s91, 0
      %s94 = sadd.s32 %s93, 1
      %s95 = scalar_select %p92, %s93, %s94
      %p98 = pneg %p92
      %p99 = scmp.eq.s32.totalorder %s15, 1
      %p100 = por %p98, %p99
      %p101 = scmp.ne.s32.totalorder %s93, %s96
      %p102 = scmp.eq.s32.totalorder %s15, 0
      %p103 = por %p101, %p102
      %p104 = scmp.ne.s32.totalorder %s93, %s96
      %p105 = scmp.eq.s32.totalorder %s20, 1
      %p106 = por %p104, %p105
      %p107 = scmp.ne.s32.totalorder %s96, %s97
      %p108 = scmp.eq.s32.totalorder %s20, 0
      %p109 = por %p107, %p108
      %p110 = scmp.ne.s32.totalorder %s96, %s97
      %p111 = scmp.eq.s32.totalorder %s21, 1
      %p112 = por %p110, %p111
      %p114 = scmp.ne.s32.totalorder %s97, %s113
      %p115 = scmp.eq.s32.totalorder %s21, 0
      %p116 = por %p114, %p115
      %s118 = sadd.s32 %s117, 1
      %p121 = scmp.eq.s32.totalorder %s15, 1
      %p122 = scmp.ne.s32.totalorder %s117, %s119
      %p123 = scmp.eq.s32.totalorder %s15, 0
      %p124 = por %p122, %p123
      %p125 = scmp.ne.s32.totalorder %s117, %s119
      %p126 = scmp.eq.s32.totalorder %s20, 1
      %p127 = por %p125, %p126
      %p128 = scmp.ne.s32.totalorder %s119, %s120
      %p129 = scmp.eq.s32.totalorder %s20, 0
      %p130 = por %p128, %p129
      %p131 = scmp.ne.s32.totalorder %s119, %s120
      %p132 = scmp.eq.s32.totalorder %s21, 1
      %p133 = por %p131, %p132
      %p135 = scmp.ne.s32.totalorder %s120, %s134
      %p136 = scmp.eq.s32.totalorder %s21, 0
      %p137 = por %p135, %p136
      %s139 = sadd.s32 %s138, 1
      %p142 = scmp.eq.s32.totalorder %s15, 1
      %p143 = scmp.ne.s32.totalorder %s138, %s140
      %p144 = scmp.eq.s32.totalorder %s15, 0
      %p145 = por %p143, %p144
      %p146 = scmp.ne.s32.totalorder %s138, %s140
      %p147 = scmp.eq.s32.totalorder %s20, 1
      %p148 = por %p146, %p147
      %p149 = scmp.ne.s32.totalorder %s140, %s141
      %p150 = scmp.eq.s32.totalorder %s20, 0
      %p151 = por %p149, %p150
      %p152 = scmp.ne.s32.totalorder %s140, %s141
      %p153 = scmp.eq.s32.totalorder %s21, 1
      %p154 = por %p152, %p153
      %p156 = scmp.ne.s32.totalorder %s141, %s155
      %p157 = scmp.eq.s32.totalorder %s21, 0
      %p158 = por %p156, %p157
      %p159 = scmp.le.s32.totalorder 1, %s15
      %p160 = scmp.lt.s32.totalorder %s15, 3
      %p161 = pnand %p159, %p160
      %p162 = pneg %p161
      // Predicated region
      $region9: #{tpu_custom_call.1} parent=5 // pred_check
        _
      $region10: #{tpu_custom_call.1} parent=5 // pred_check_branch
        %164 = sbr.rel (%p161) target = $region12
      $region11: #{tpu_custom_call.1} parent=5 // pred_region
        %s165 = ssub.s32 %s15, 1
        // Predicated region
        $region13: #{tpu_custom_call.1} parent=11 // pred_check
          %p166 = pneg %p62
        $region14: #{tpu_custom_call.1} parent=11 // pred_check_branch
          %168 = sbr.rel (%p166) target = $region16
        $region15: #{tpu_custom_call.1} parent=11 // pred_region
          _
        $region16: #{tpu_custom_call.1} parent=11 // pred_fallthru
          _
        // Predicated region
        $region17: #{tpu_custom_call.1} parent=11 // pred_check
          %p169 = pneg %p83
        $region18: #{tpu_custom_call.1} parent=11 // pred_check_branch
          %171 = sbr.rel (%p169) target = $region20
        $region19: #{tpu_custom_call.1} parent=11 // pred_region
          _
        $region20: #{tpu_custom_call.1} parent=11 // pred_fallthru
          _
      $region12: #{tpu_custom_call.1} parent=5 // pred_fallthru
        _
      %p172 = scmp.lt.s32.totalorder %s15, 2
      // Predicated region
      $region21: #{tpu_custom_call.1} parent=5 // pred_check
        %p173 = pneg %p172
      $region22: #{tpu_custom_call.1} parent=5 // pred_check_branch
        %175 = sbr.rel (%p173) target = $region24
      $region23: #{tpu_custom_call.1} parent=5 // pred_region
        // Predicated region
        $region25: #{tpu_custom_call.1} parent=23 // pred_check
          %p176 = pneg %p35
        $region26: #{tpu_custom_call.1} parent=23 // pred_check_branch
          %178 = sbr.rel (%p176) target = $region28
        $region27: #{tpu_custom_call.1} parent=23 // pred_region
          %p179 = scmp.lt.s32.totalorder %s15, 1
          %s180 = scalar_select %p179, %s15, 1
          %s181 = smul.addr %s180, 4
          %s182 = scalar_lea.vmem %s0, %s181
        $region28: #{tpu_custom_call.1} parent=23 // pred_fallthru
          _
      $region24: #{tpu_custom_call.1} parent=5 // pred_fallthru
        _
      %p183 = scmp.le.s32.totalorder 1, %s15
      %p184 = scmp.lt.s32.totalorder %s15, 3
      %p185 = pnand %p183, %p184
      %p186 = pneg %p185
      // Predicated region
      $region29: #{tpu_custom_call.1} parent=5 // pred_check
        _
      $region30: #{tpu_custom_call.1} parent=5 // pred_check_branch
        %188 = sbr.rel (%p185) target = $region32
      $region31: #{tpu_custom_call.1} parent=5 // pred_region
        %s189 = ssub.s32 %s15, 1
        %p190 = scmp.lt.s32.totalorder %s20, 1
        %s191 = scalar_select %p190, %s20, 1
        %s192 = smul.addr %s191, 4
        %s193 = scalar_lea.vmem %s0, %s192
        %p194 = pneg %p41
        %p195 = pneg %p38
        %p196 = pneg %p62
        %p197 = pneg %p59
        %p198 = pneg %p83
        %p199 = pneg %p80
        %p200 = pneg %p109
        %p201 = pneg %p106
        %s202 = sand.u32 %s96, 1
        %s203 = scalar_lea.sflag [#allocation3], %s202
        %s204 = sand.u32 %s96, 1
        %s205 = smul.addr %s204, 32
        %s206 = scalar_lea.vmem [#allocation2], %s205
        %p207 = pneg %p130
        %p208 = pneg %p127
        %p209 = pneg %p151
        %p210 = pneg %p148
        %p211 = scmp.lt.s32.totalorder %s20, 1
        %s212 = scalar_select %p211, %s20, 1
        %s213 = smul.addr %s212, 4
        %s214 = scalar_lea.vmem %s0, %s213
        %v216 = vld [vmem:[%s214] sm:$0xf]
        %v217 = vld [vmem:[%s1] sm:$0xf]
        %v218 = vld [vmem:[%s1 + $0x4] sm:$0xf]
        %v219 = vld [vmem:[%s1 + $0x8] sm:$0xf]
        %v220 = vld [vmem:[%s1 + $0xc] sm:$0xf]
        %v221 = vpack.c.bf16 %v216, %v216
        %v222 = vld [vmem:[%s2] sm:$0xff]
        %v223 = vld [vmem:[%s2 + $0x8] sm:$0xff]
        %v224 = vld [vmem:[%s2 + $0x10] sm:$0xff]
        %v225 = vld [vmem:[%s2 + $0x18] sm:$0xff]
        %227 = vset.pattern.permute.xlu0 0
        %228 = vperm.xlu0 %227, %v222
        %v229 = vpop.permute.xlu0 %228
        %232 = vset.pattern.permute.xlu0 0
        %233 = vperm.xlu0 %232, %v223
        %v234 = vpop.permute.xlu0 %233
        %237 = vset.pattern.permute.xlu0 0
        %238 = vperm.xlu0 %237, %v224
        %v239 = vpop.permute.xlu0 %238
        %242 = vset.pattern.permute.xlu0 0
        %243 = vperm.xlu0 %242, %v225
        %v244 = vpop.permute.xlu0 %243
        %v250 = vunpack.c.l.b16 %v217
        %v251 = vunpack.c.l.b16 %v218
        %v252 = vunpack.c.l.b16 %v219
        %v253 = vunpack.c.l.b16 %v220
        %v254 = vpack.c.b16 %v251, %v250
        %v255 = vpack.c.b16 %v253, %v252
        %vm256 = vcmask 31744
        %v258 = vsel %vm256, %v254, 0
        %v261 = vsel %vm256, %v255, 0
        %vm263 = vcmask 1041408
        %v265 = vsel %vm263, %v221, 0
        %267 = vmatpush.bf16.msra.mxu0 0
        %268 = vmatpush.bf16.msra.mxu0 0
        %269 = vmatpush.bf16.msra.mxu0 0
        %270 = vmatpush.bf16.msra.mxu0 0
        %271 = vmatpush.bf16.msra.mxu0 0
        %272 = vmatpush.bf16.msra.mxu0 0
        %273 = vmatpush.bf16.msra.mxu0 0
        %274 = vmatpush.bf16.msra.mxu0 %v265
        %275 = vmatmul.bf16.gmra.mxu0 %v258
        %v276 = vpop.f32.mrf.mxu0
        %v277 = vadd.f32 %v229, %v276
        %v278 = vpop.f32.mrf.mxu0
        %v279 = vadd.f32 %v234, %v278
        %280 = vmatmul.bf16.gmra.mxu0 %v261
        %v281 = vpop.f32.mrf.mxu0
        %v282 = vadd.f32 %v239, %v281
        %v283 = vpop.f32.mrf.mxu0
        %v284 = vadd.f32 %v244, %v283
        %285 = vdwg.mxu0
        %286 = vst [vmem:[%s206] sm:$0xff] %v277
        %287 = vst [vmem:[%s206 + $0x8] sm:$0xff] %v279
        %288 = vst [vmem:[%s206 + $0x10] sm:$0xff] %v282
        %289 = vst [vmem:[%s206 + $0x18] sm:$0xff] %v284
        %290 = vadd.xlane.f32.xlu0 %v277
        %v291 = vpop.xlane.xlu0 %290
        %292 = vadd.xlane.f32.xlu0 %v279
        %v293 = vpop.xlane.xlu0 %292
        %294 = vadd.xlane.f32.xlu0 %v282
        %v295 = vpop.xlane.xlu0 %294
        %296 = vadd.xlane.f32.xlu0 %v284
        %v297 = vpop.xlane.xlu0 %296
        %v298 = vmul.f32 %v277, %v277
        %v299 = vmul.f32 %v279, %v279
        %v300 = vmul.f32 %v282, %v282
        %v301 = vmul.f32 %v284, %v284
        %302 = vadd.xlane.f32.xlu0 %v298
        %v303 = vpop.xlane.xlu0 %302
        %304 = vadd.xlane.f32.xlu0 %v299
        %v305 = vpop.xlane.xlu0 %304
        %306 = vadd.xlane.f32.xlu0 %v300
        %v307 = vpop.xlane.xlu0 %306
        %308 = vadd.xlane.f32.xlu0 %v301
        %v309 = vpop.xlane.xlu0 %308
        %p310 = scmp.eq.s32.totalorder %s20, 0
        // Predicated region
        $region33: #{tpu_custom_call.1} parent=31 // pred_check
          %p311 = pneg %p310
        $region34: #{tpu_custom_call.1} parent=31 // pred_check_branch
          %313 = sbr.rel (%p311) target = $region36
        $region35: #{tpu_custom_call.1} parent=31 // pred_region
          %vm314 = vcmask 7168
          %315 = vst.msk [vmem:[%s4] sm:$0xff] %vm314, %v291
          %316 = vst.msk [vmem:[%s4 + $0x8] sm:$0xff] %vm314, %v293
          %317 = vst.msk [vmem:[%s4 + $0x10] sm:$0xff] %vm314, %v295
          %318 = vst.msk [vmem:[%s4 + $0x18] sm:$0xff] %vm314, %v297
          %319 = vst.msk [vmem:[%s5] sm:$0xff] %vm314, %v303
          %320 = vst.msk [vmem:[%s5 + $0x8] sm:$0xff] %vm314, %v305
          %321 = vst.msk [vmem:[%s5 + $0x10] sm:$0xff] %vm314, %v307
          %322 = vst.msk [vmem:[%s5 + $0x18] sm:$0xff] %vm314, %v309
        $region36: #{tpu_custom_call.1} parent=31 // pred_fallthru
          _
        %p323 = scmp.gt.s32.totalorder %s20, 0
        // Predicated region
        $region37: #{tpu_custom_call.1} parent=31 // pred_check
          %p324 = pneg %p323
        $region38: #{tpu_custom_call.1} parent=31 // pred_check_branch
          %326 = sbr.rel (%p324) target = $region40
        $region39: #{tpu_custom_call.1} parent=31 // pred_region
          %v327 = vld [vmem:[%s4] sm:$0xff]
          %v328 = vld [vmem:[%s4 + $0x8] sm:$0xff]
          %v329 = vld [vmem:[%s4 + $0x10] sm:$0xff]
          %v330 = vld [vmem:[%s4 + $0x18] sm:$0xff]
          %v331 = vadd.f32 %v327, %v291
          %v332 = vadd.f32 %v328, %v293
          %v333 = vadd.f32 %v329, %v295
          %v334 = vadd.f32 %v330, %v297
          %vm335 = vcmask 7168
          %336 = vst.msk [vmem:[%s4] sm:$0xff] %vm335, %v331
          %337 = vst.msk [vmem:[%s4 + $0x8] sm:$0xff] %vm335, %v332
          %338 = vst.msk [vmem:[%s4 + $0x10] sm:$0xff] %vm335, %v333
          %339 = vst.msk [vmem:[%s4 + $0x18] sm:$0xff] %vm335, %v334
          %v340 = vld [vmem:[%s5] sm:$0xff]
          %v341 = vld [vmem:[%s5 + $0x8] sm:$0xff]
          %v342 = vld [vmem:[%s5 + $0x10] sm:$0xff]
          %v343 = vld [vmem:[%s5 + $0x18] sm:$0xff]
          %v344 = vadd.f32 %v340, %v303
          %v345 = vadd.f32 %v341, %v305
          %v346 = vadd.f32 %v342, %v307
          %v347 = vadd.f32 %v343, %v309
          %348 = vst.msk [vmem:[%s5] sm:$0xff] %vm335, %v344
          %349 = vst.msk [vmem:[%s5 + $0x8] sm:$0xff] %vm335, %v345
          %350 = vst.msk [vmem:[%s5 + $0x10] sm:$0xff] %vm335, %v346
          %351 = vst.msk [vmem:[%s5 + $0x18] sm:$0xff] %vm335, %v347
        $region40: #{tpu_custom_call.1} parent=31 // pred_fallthru
          _
        %s352 = sand.u32 %s96, 1
        %s353 = scalar_lea.sflag [#allocation3], %s352
        %s354 = sand.u32 %s96, 1
        %s355 = smul.addr %s354, 32
        %s356 = scalar_lea.vmem [#allocation2], %s355
        // Predicated region
        $region41: #{tpu_custom_call.1} parent=31 // pred_check
          %p357 = pneg %p106
        $region42: #{tpu_custom_call.1} parent=31 // pred_check_branch
          %359 = sbr.rel (%p357) target = $region44
        $region43: #{tpu_custom_call.1} parent=31 // pred_region
          %361 = vsyncadd %s353, 0
          %s362 = smul.addr %s20, 4
          %s363 = smul.addr %s362, 8
          %s364 = scalar_lea.hbm %s3, %s363
          %s365 = sshll.u32 %s356, 4
          %s366 = int_to_ptr.vmem [resolvable:$true] %s365
          %s367 = sshll.u32 %s364, 4
          %s368 = int_to_ptr.hbm [resolvable:$true] %s367
          %373 = dma.vmem_to_hbm [thread:$0]  %s366, 512, %s368, %s353, 128, 128, 8
        $region44: #{tpu_custom_call.1} parent=31 // pred_fallthru
          _
        // Predicated region
        $region45: #{tpu_custom_call.1} parent=31 // pred_check
          %p374 = pneg %p127
        $region46: #{tpu_custom_call.1} parent=31 // pred_check_branch
          %376 = sbr.rel (%p374) target = $region48
        $region47: #{tpu_custom_call.1} parent=31 // pred_region
          _
        $region48: #{tpu_custom_call.1} parent=31 // pred_fallthru
          _
        // Predicated region
        $region49: #{tpu_custom_call.1} parent=31 // pred_check
          %p377 = pneg %p148
        $region50: #{tpu_custom_call.1} parent=31 // pred_check_branch
          %379 = sbr.rel (%p377) target = $region52
        $region51: #{tpu_custom_call.1} parent=31 // pred_region
          _
        $region52: #{tpu_custom_call.1} parent=31 // pred_fallthru
          _
        // Predicated region
        $region53: #{tpu_custom_call.1} parent=31 // pred_check
          %p380 = pneg %p127
        $region54: #{tpu_custom_call.1} parent=31 // pred_check_branch
          %382 = sbr.rel (%p380) target = $region56
        $region55: #{tpu_custom_call.1} parent=31 // pred_region
          _
        $region56: #{tpu_custom_call.1} parent=31 // pred_fallthru
          _
        // Predicated region
        $region57: #{tpu_custom_call.1} parent=31 // pred_check
          %p383 = pneg %p148
        $region58: #{tpu_custom_call.1} parent=31 // pred_check_branch
          %385 = sbr.rel (%p383) target = $region60
        $region59: #{tpu_custom_call.1} parent=31 // pred_region
          _
        $region60: #{tpu_custom_call.1} parent=31 // pred_fallthru
          _
      $region32: #{tpu_custom_call.1} parent=5 // pred_fallthru
        _
      %p386 = scmp.le.s32.totalorder 2, %s15
      // Predicated region
      $region61: #{tpu_custom_call.1} parent=5 // pred_check
        %p387 = pneg %p386
      $region62: #{tpu_custom_call.1} parent=5 // pred_check_branch
        %389 = sbr.rel (%p387) target = $region64
      $region63: #{tpu_custom_call.1} parent=5 // pred_region
        %s390 = ssub.s32 %s15, 2
        // Predicated region
        $region65: #{tpu_custom_call.1} parent=63 // pred_check
          %p391 = pneg %p112
        $region66: #{tpu_custom_call.1} parent=63 // pred_check_branch
          %393 = sbr.rel (%p391) target = $region68
        $region67: #{tpu_custom_call.1} parent=63 // pred_region
          %s394 = sand.u32 %s97, 1
          %s395 = scalar_lea.sflag [#allocation3], %s394
          %s396 = sand.u32 %s97, 1
          %s397 = smul.addr %s396, 32
          %s398 = scalar_lea.vmem [#allocation2], %s397
          %400 = dma.done %s395, 512
        $region68: #{tpu_custom_call.1} parent=63 // pred_fallthru
          _
      $region64: #{tpu_custom_call.1} parent=5 // pred_fallthru
        _
    $region6: #{tpu_custom_call.1} parent=1 // loop_footer
      %s19 = sadd.s32 1, %s15
    $region7: #{tpu_custom_call.1} parent=1 // loop_footer_branch
      %14 = sbr.rel target = $region3
    $region8: #{tpu_custom_call.1} parent=1 // loop_exit
      _
    %401 = vsyncpa [#allocation3], 1
    %s402 = scalar_lea.sflag [#allocation3], 1
    %403 = vsyncpa %s402, 1

</llo_original>
